<compile_context>
chip_gen: v6e
topology: v6e:2x2x1
jax: 0.10.0
libtpu: 0.0.40
codegen_flags: <defaults>
</compile_context>

<pallas_src>
import jax
import jax.numpy as jnp
from jax.experimental import pallas as pl
from jax.experimental.pallas import tpu as pltpu


def _pos_embed_add_kernel(x_ref, pos_ref, w_ref, b_ref, o_ref, proj_ref):
    """x_ref/o_ref: (C, T); pos_ref: (4, T); w_ref: (C, 4); b_ref: (C, 1);
    proj_ref: (C, T) VMEM scratch holding the 1x1-conv projection for this tile."""
    # grid = (n_hw, B): batch (axis 1) is the inner/fast axis, so the projection for
    # this spatial tile is computed once (b == 0) and reused across the whole batch.
    @pl.when(pl.program_id(1) == 0)
    def _():
        pos = pos_ref[...].astype(jnp.float32)   # (4, T)
        w = w_ref[...].astype(jnp.float32)       # (C, 4)
        # 1x1 conv over 4 channels == 4 broadcast multiply-adds (f32 accumulate).
        proj = (w[:, 0:1] * pos[0:1, :]
                + w[:, 1:2] * pos[1:2, :]
                + w[:, 2:3] * pos[2:3, :]
                + w[:, 3:4] * pos[3:4, :]
                + b_ref[...].astype(jnp.float32))            # (C, T) f32
        proj_ref[...] = proj.astype(proj_ref.dtype)          # cast once per tile

    # Steady state: one elementwise add per element -> pure HBM-roofline streaming.
    o_ref[...] = (x_ref[...] + proj_ref[...]).astype(o_ref.dtype)


def make_linear_position_embedding(height: int, width: int) -> jnp.ndarray:
    """(4, H, W) float32: [north, south, west, east] ramps (matches the PyTorch buffer)."""
    w_ramp = jnp.linspace(0.0, 1.0, width)    # east increases along width
    h_ramp = jnp.linspace(0.0, 1.0, height)   # south increases along height
    east = jnp.broadcast_to(w_ramp[None, :], (height, width))
    west = jnp.broadcast_to(1.0 - w_ramp[None, :], (height, width))
    south = jnp.broadcast_to(h_ramp[:, None], (height, width))
    north = jnp.broadcast_to(1.0 - h_ramp[:, None], (height, width))
    return jnp.stack([north, south, west, east], axis=0).astype(jnp.float32)


def _pick_hw_tile(hw_padded: int, c: int, itemsize: int,
                  target_bytes: int = 4 << 20) -> int:
    """Largest T with T % 128 == 0, hw_padded % T == 0, C*T*itemsize <= target_bytes.

    hw_padded must already be a multiple of 128 (the wrapper guarantees this), so
    total VMEM footprint stays ~5x block (2x in + 2x out + proj scratch) + small.
    """
    t_cap = max(128, (target_bytes // max(1, c * itemsize)) // 128 * 128)
    t = min(hw_padded, t_cap)
    while hw_padded % t != 0:
        t -= 128
    return t


def positional_embedding_forward(x_nchw, weight, bias, pos_4hw, *, hw_tile=None,
                                 vmem_limit_bytes=32 << 20):
    """x_nchw: (B, C, H, W); weight: (C, 4) (Conv2d weight squeezed); bias: (C,);
    pos_4hw: (4, H, W). Returns (B, C, H, W) = x + conv1x1(pos)."""
    B, C, H, W = x_nchw.shape
    HW = H * W

    # Free, contiguous reshapes only (no NCHW<->NHWC transposes).
    x_flat = x_nchw.reshape(B, C, HW)
    pos_flat = pos_4hw.reshape(4, HW)
    bias2d = bias.reshape(C, 1)

    # Pad the flattened spatial axis up to a multiple of 128 so every tile is
    # lane-dense (unmasked vst) and per-block VMEM stays bounded even when H*W
    # is not a multiple of 128.  Padded columns are sliced off afterwards.
    HW_pad = ((HW + 127) // 128) * 128
    if HW_pad != HW:
        x_flat = jnp.pad(x_flat, ((0, 0), (0, 0), (0, HW_pad - HW)))
        pos_flat = jnp.pad(pos_flat, ((0, 0), (0, HW_pad - HW)))

    if hw_tile is None:
        hw_tile = _pick_hw_tile(HW_pad, C, jnp.dtype(x_nchw.dtype).itemsize)
    assert HW_pad % hw_tile == 0 and hw_tile % 128 == 0
    n_hw = HW_pad // hw_tile

    out_flat = pl.pallas_call(
        _pos_embed_add_kernel,
        out_shape=jax.ShapeDtypeStruct((B, C, HW_pad), x_nchw.dtype),
        grid_spec=pltpu.PrefetchScalarGridSpec(
            num_scalar_prefetch=0,
            grid=(n_hw, B),                                   # spatial outer, batch inner
            in_specs=[
                pl.BlockSpec((pl.Squeezed(), C, hw_tile), lambda t, b: (b, 0, t)),  # x
                pl.BlockSpec((4, hw_tile), lambda t, b: (0, t)),                    # pos
                pl.BlockSpec((C, 4), lambda t, b: (0, 0)),                          # weight
                pl.BlockSpec((C, 1), lambda t, b: (0, 0)),                          # bias
            ],
            out_specs=pl.BlockSpec((pl.Squeezed(), C, hw_tile),
                                   lambda t, b: (b, 0, t)),
            scratch_shapes=[pltpu.VMEM((C, hw_tile), x_nchw.dtype)],  # proj, per-tile
        ),
        compiler_params=pltpu.CompilerParams(
            dimension_semantics=("parallel", "arbitrary"),
            vmem_limit_bytes=vmem_limit_bytes),
    )(x_flat, pos_flat, weight, bias2d)

    if HW_pad != HW:
        out_flat = out_flat[:, :, :HW]
    return out_flat.reshape(B, C, H, W)


if __name__ == "__main__":
    B, C, H, W = 2, 32, 16, 16

    key = jax.random.PRNGKey(0)
    kx, kw, kb = jax.random.split(key, 3)

    x = jax.random.normal(kx, (B, C, H, W), dtype=jnp.float32)
    # Deterministic init mimicking nn.Conv2d(4, C, 1): uniform(-1/sqrt(4), 1/sqrt(4))
    bound = 0.5
    weight = jax.random.uniform(kw, (C, 4), minval=-bound, maxval=bound,
                                dtype=jnp.float32)   # (out=C, in=4)
    bias = jax.random.uniform(kb, (C,), minval=-bound, maxval=bound,
                              dtype=jnp.float32)

    pos = make_linear_position_embedding(H, W)       # (4, H, W)

    out = positional_embedding_forward(x, weight, bias, pos)
    out = jax.block_until_ready(out)

    # Pure-JAX reference: 1x1 conv over the positional buffer + residual add.
    proj_ref = jnp.einsum('ck,khw->chw', weight, pos) + bias[:, None, None]
    ref = x + proj_ref[None]
    assert out.shape == (B, C, H, W)
    assert jnp.allclose(out, ref, atol=1e-5, rtol=1e-5), "mismatch vs reference"

    print("KERNEL_OK")
</pallas_src>

<mosaic_0001>
module attributes {stable_mosaic.version = 11 : i64} {
  func.func @_pos_embed_add_kernel(%arg0: i32, %arg1: i32, %arg2: memref<1x32x256xf32, #tpu.memory_space<vmem>>, %arg3: memref<4x256xf32, #tpu.memory_space<vmem>>, %arg4: memref<32x4xf32, #tpu.memory_space<vmem>>, %arg5: memref<32x1xf32, #tpu.memory_space<vmem>>, %arg6: memref<1x32x256xf32, #tpu.memory_space<vmem>>, %arg7: memref<32x256xf32, #tpu.memory_space<vmem>>) attributes {dimension_semantics = [#tpu.dimension_semantics<parallel>, #tpu.dimension_semantics<arbitrary>], iteration_bounds = array<i64: 1, 2>, scalar_prefetch = 0 : i64, scratch_operands = 1 : i64, tpu.core_type = #tpu.core_type<tc>, window_params = [{transform_indices = @transform_0, window_bounds = array<i64: 1, 32, 256>}, {transform_indices = @transform_1, window_bounds = array<i64: 4, 256>}, {pipeline_mode = #tpu.pipeline_mode<synchronous>, transform_indices = @transform_2, window_bounds = array<i64: 32, 4>}, {pipeline_mode = #tpu.pipeline_mode<synchronous>, transform_indices = @transform_3, window_bounds = array<i64: 32, 1>}, {transform_indices = @transform_4, window_bounds = array<i64: 1, 32, 256>}]} {
    %c0_i32 = arith.constant 0 : i32
    %0 = arith.cmpi eq, %arg1, %c0_i32 : i32
    %1 = arith.extui %0 : i1 to i32
    %c0_i32_0 = arith.constant 0 : i32
    %2 = arith.cmpi ne, %1, %c0_i32_0 : i32
    scf.if %2 {
      %c0_8 = arith.constant 0 : index
      %c0_9 = arith.constant 0 : index
      %10 = vector.load %arg3[%c0_8, %c0_9] : memref<4x256xf32, #tpu.memory_space<vmem>>, vector<4x256xf32>
      %c0_10 = arith.constant 0 : index
      %c0_11 = arith.constant 0 : index
      %11 = vector.load %arg4[%c0_10, %c0_11] : memref<32x4xf32, #tpu.memory_space<vmem>>, vector<32x4xf32>
      %12 = vector.extract_strided_slice %11 {offsets = [0, 0], sizes = [32, 1], strides = [1, 1]} : vector<32x4xf32> to vector<32x1xf32>
      %13 = vector.extract_strided_slice %10 {offsets = [0, 0], sizes = [1, 256], strides = [1, 1]} : vector<4x256xf32> to vector<1x256xf32>
      %14 = vector.broadcast %12 : vector<32x1xf32> to vector<32x256xf32>
      %15 = vector.broadcast %13 : vector<1x256xf32> to vector<32x256xf32>
      %16 = arith.mulf %14, %15 : vector<32x256xf32>
      %17 = vector.extract_strided_slice %11 {offsets = [0, 1], sizes = [32, 1], strides = [1, 1]} : vector<32x4xf32> to vector<32x1xf32>
      %18 = vector.extract_strided_slice %10 {offsets = [1, 0], sizes = [1, 256], strides = [1, 1]} : vector<4x256xf32> to vector<1x256xf32>
      %19 = vector.broadcast %17 : vector<32x1xf32> to vector<32x256xf32>
      %20 = vector.broadcast %18 : vector<1x256xf32> to vector<32x256xf32>
      %21 = arith.mulf %19, %20 : vector<32x256xf32>
      %22 = arith.addf %16, %21 : vector<32x256xf32>
      %23 = vector.extract_strided_slice %11 {offsets = [0, 2], sizes = [32, 1], strides = [1, 1]} : vector<32x4xf32> to vector<32x1xf32>
      %24 = vector.extract_strided_slice %10 {offsets = [2, 0], sizes = [1, 256], strides = [1, 1]} : vector<4x256xf32> to vector<1x256xf32>
      %25 = vector.broadcast %23 : vector<32x1xf32> to vector<32x256xf32>
      %26 = vector.broadcast %24 : vector<1x256xf32> to vector<32x256xf32>
      %27 = arith.mulf %25, %26 : vector<32x256xf32>
      %28 = arith.addf %22, %27 : vector<32x256xf32>
      %29 = vector.extract_strided_slice %11 {offsets = [0, 3], sizes = [32, 1], strides = [1, 1]} : vector<32x4xf32> to vector<32x1xf32>
      %30 = vector.extract_strided_slice %10 {offsets = [3, 0], sizes = [1, 256], strides = [1, 1]} : vector<4x256xf32> to vector<1x256xf32>
      %31 = vector.broadcast %29 : vector<32x1xf32> to vector<32x256xf32>
      %32 = vector.broadcast %30 : vector<1x256xf32> to vector<32x256xf32>
      %33 = arith.mulf %31, %32 : vector<32x256xf32>
      %34 = arith.addf %28, %33 : vector<32x256xf32>
      %c0_12 = arith.constant 0 : index
      %c0_13 = arith.constant 0 : index
      %35 = vector.load %arg5[%c0_12, %c0_13] : memref<32x1xf32, #tpu.memory_space<vmem>>, vector<32x1xf32>
      %36 = vector.broadcast %35 : vector<32x1xf32> to vector<32x256xf32>
      %37 = arith.addf %34, %36 : vector<32x256xf32>
      %c0_14 = arith.constant 0 : index
      %c0_15 = arith.constant 0 : index
      %38 = vector.load %arg7[%c0_14, %c0_15] : memref<32x256xf32, #tpu.memory_space<vmem>>, vector<32x256xf32>
      tpu.vector_store %arg7[%c0_14, %c0_15], %37 {strides = array<i32>} : memref<32x256xf32, #tpu.memory_space<vmem>>, vector<32x256xf32>,
    } else {
    }
    %c0 = arith.constant 0 : index
    %c0_1 = arith.constant 0 : index
    %c0_2 = arith.constant 0 : index
    %3 = vector.load %arg2[%c0, %c0_1, %c0_2] : memref<1x32x256xf32, #tpu.memory_space<vmem>>, vector<1x32x256xf32>
    %4 = vector.shape_cast %3 : vector<1x32x256xf32> to vector<32x256xf32>
    %c0_3 = arith.constant 0 : index
    %c0_4 = arith.constant 0 : index
    %5 = vector.load %arg7[%c0_3, %c0_4] : memref<32x256xf32, #tpu.memory_space<vmem>>, vector<32x256xf32>
    %6 = arith.addf %4, %5 : vector<32x256xf32>
    %c0_5 = arith.constant 0 : index
    %c0_6 = arith.constant 0 : index
    %c0_7 = arith.constant 0 : index
    %7 = vector.load %arg6[%c0_5, %c0_6, %c0_7] : memref<1x32x256xf32, #tpu.memory_space<vmem>>, vector<1x32x256xf32>
    %8 = vector.shape_cast %7 : vector<1x32x256xf32> to vector<32x256xf32>
    %9 = vector.shape_cast %6 : vector<32x256xf32> to vector<1x32x256xf32>
    tpu.vector_store %arg6[%c0_5, %c0_6, %c0_7], %9 {strides = array<i32>} : memref<1x32x256xf32, #tpu.memory_space<vmem>>, vector<1x32x256xf32>,
    return
  }
  func.func @transform_0(%arg0: i32, %arg1: i32) -> (i32, i32, i32) {
    %c0_i32 = arith.constant 0 : i32
    %c0_i32_0 = arith.constant 0 : i32
    return %arg1, %c0_i32, %arg0 : i32, i32, i32
  }
  func.func @transform_1(%arg0: i32, %arg1: i32) -> (i32, i32) {
    %c0_i32 = arith.constant 0 : i32
    %c0_i32_0 = arith.constant 0 : i32
    return %c0_i32, %arg0 : i32, i32
  }
  func.func @transform_2(%arg0: i32, %arg1: i32) -> (i32, i32) {
    %c0_i32 = arith.constant 0 : i32
    %c0_i32_0 = arith.constant 0 : i32
    %c0_i32_1 = arith.constant 0 : i32
    return %c0_i32, %c0_i32_0 : i32, i32
  }
  func.func @transform_3(%arg0: i32, %arg1: i32) -> (i32, i32) {
    %c0_i32 = arith.constant 0 : i32
    %c0_i32_0 = arith.constant 0 : i32
    %c0_i32_1 = arith.constant 0 : i32
    return %c0_i32, %c0_i32_0 : i32, i32
  }
  func.func @transform_4(%arg0: i32, %arg1: i32) -> (i32, i32, i32) {
    %c0_i32 = arith.constant 0 : i32
    %c0_i32_0 = arith.constant 0 : i32
    return %arg1, %c0_i32, %arg0 : i32, i32, i32
  }
}

</mosaic_0001>

<llo_original>
// kernel: tpu_custom_call.1
$region0: #{tpu_custom_call.1}
  #allocation0 [shape = 'u32[]', space=smem, size = 0x4, offset = 0x4, fixed_abs, tag = 'smem constant byte address 0x4 - core index']
  #allocation1 [shape = 'u32[144,128]{1,0:T(1,128)}', space=vmem, size = 0x12000, scoped, tag = 'internal scratch']
  #allocation2 [shape = 'f32[32,256]{1,0:T(8,128)}', space=vmem, size = 0x8000, scoped, tag = 'scratch operand']
  %s0 = inlined_call_operand.hbm [shape: f32[2,32,256], index: 0, kind: input, shape index: {}]
  %s1 = inlined_call_operand.vmem [shape: f32[4,256], index: 1, kind: input, shape index: {}]
  %s2 = inlined_call_operand.vmem [shape: f32[32,4], index: 2, kind: input, shape index: {}]
  %s3 = inlined_call_operand.vmem [shape: f32[32,1], index: 3, kind: input, shape index: {}]
  %s4 = inlined_call_operand.hbm [shape: f32[2,32,256], index: 4, kind: output, shape index: {}]
  %s5 = sld [smem:[#allocation0]]
  $region57: #{tpu_custom_call.1} parent=0
    _
  %s7 = ssub.s32 1, %s5
  %s8 = scalar_select 0, %s7, %s5
  $region1: #{tpu_custom_call.1} parent=0
    #allocation3 [shape = 'u8[65536]{0}', space=vmem, size = 0x10000, scoped, tag = 'input window, operand 0']
    #allocation4 [shape = 's32[2]{0}', space=sflag, size = 0x8, scoped, tag = 'scoped memory for tpu_custom_call.1']
    #allocation5 [shape = 's32[2]{0}', space=sflag, size = 0x8, scoped, tag = 'scoped memory for tpu_custom_call.1']
    #allocation6 [shape = 'u8[65536]{0}', space=vmem, size = 0x10000, scoped, tag = 'output window, operand 0']
    %9 = vsyncpa [#allocation4], 0
    %s10 = scalar_lea.sflag [#allocation4], 1
    %11 = vsyncpa %s10, 0
    %12 = vsyncpa [#allocation5], 0
    %s13 = scalar_lea.sflag [#allocation5], 1
    %14 = vsyncpa %s13, 0
    loop: start=0, step=1, limit=4
    $region2: #{tpu_custom_call.1} parent=1 // loop_pre_header
      _
    $region3: #{tpu_custom_call.1} parent=1 // loop_header
      %s16 = sphi 0, %s20
      %p17 = scmp.ge.s32.totalorder %s16, 4
      %s23 = sphi 0, %s35
      %s24 = sphi 0, %s31
      %s25 = sphi 0, %s23
      %s26 = sphi 0, %s24
      %s27 = sphi 0, %s25
      %s28 = sphi 0, %s26
      %s40 = sphi 0, %s42
      %s43 = sphi 0, %s40
      %s44 = sphi 0, %s43
      %s60 = sphi 0, %s44
      %s66 = sphi 0, %s68
      %s69 = sphi 0, %s66
      %s70 = sphi 0, %s69
      %s86 = sphi 0, %s70
      %s90 = sphi 0, %s90
      %s92 = sphi 0, %s90
      %s93 = sphi 0, %s92
      %s107 = sphi 0, %s93
      %s111 = sphi 0, %s111
      %s113 = sphi 0, %s111
      %s114 = sphi 0, %s113
      %s128 = sphi 0, %s114
      %s136 = sphi 0, %s138
      %s139 = sphi 0, %s136
      %s140 = sphi 0, %s139
      %s156 = sphi 0, %s140
    $region4: #{tpu_custom_call.1} parent=1 // loop_header_branch
      %19 = sbr.rel (%p17) target = $region8
    $region5: #{tpu_custom_call.1} parent=1 // loop_body
      %s21 = ssub.s32 %s16, 1
      %s22 = ssub.s32 %s16, 2
      %s29 = sadd.s32 1, %s24
      %p30 = scmp.ge.s32.totalorder %s29, 2
      %s31 = scalar_select %p30, 0, %s29
      %s32 = sadd.s32 1, %s23
      %s33 = scalar_select %p30, %s32, %s23
      %p34 = scmp.ge.s32.totalorder %s33, 1
      %s35 = scalar_select %p34, 0, %s33
      %s36 = ssub.s32 %s24, %s31
      %s37 = ssub.s32 %s23, %s35
      %s38 = sor.u32 %s36, %s37
      %p39 = scmp.eq.s32.totalorder %s38, 0
      %s41 = sadd.s32 %s40, 1
      %s42 = scalar_select %p39, %s40, %s41
      %p45 = pneg %p39
      %p46 = scmp.eq.s32.totalorder %s16, 1
      %p47 = por %p45, %p46
      %p48 = scmp.ne.s32.totalorder %s40, %s43
      %p49 = scmp.eq.s32.totalorder %s16, 0
      %p50 = por %p48, %p49
      %p51 = scmp.ne.s32.totalorder %s40, %s43
      %p52 = scmp.eq.s32.totalorder %s21, 1
      %p53 = por %p51, %p52
      %p54 = scmp.ne.s32.totalorder %s43, %s44
      %p55 = scmp.eq.s32.totalorder %s21, 0
      %p56 = por %p54, %p55
      %p57 = scmp.ne.s32.totalorder %s43, %s44
      %p58 = scmp.eq.s32.totalorder %s22, 1
      %p59 = por %p57, %p58
      %p61 = scmp.ne.s32.totalorder %s44, %s60
      %p62 = scmp.eq.s32.totalorder %s22, 0
      %p63 = por %p61, %p62
      %s64 = ssub.s32 %s23, %s35
      %p65 = scmp.eq.s32.totalorder %s64, 0
      %s67 = sadd.s32 %s66, 1
      %s68 = scalar_select %p65, %s66, %s67
      %p71 = pneg %p65
      %p72 = scmp.eq.s32.totalorder %s16, 1
      %p73 = por %p71, %p72
      %p74 = scmp.ne.s32.totalorder %s66, %s69
      %p75 = scmp.eq.s32.totalorder %s16, 0
      %p76 = por %p74, %p75
      %p77 = scmp.ne.s32.totalorder %s66, %s69
      %p78 = scmp.eq.s32.totalorder %s21, 1
      %p79 = por %p77, %p78
      %p80 = scmp.ne.s32.totalorder %s69, %s70
      %p81 = scmp.eq.s32.totalorder %s21, 0
      %p82 = por %p80, %p81
      %p83 = scmp.ne.s32.totalorder %s69, %s70
      %p84 = scmp.eq.s32.totalorder %s22, 1
      %p85 = por %p83, %p84
      %p87 = scmp.ne.s32.totalorder %s70, %s86
      %p88 = scmp.eq.s32.totalorder %s22, 0
      %p89 = por %p87, %p88
      %s91 = sadd.s32 %s90, 1
      %p94 = scmp.eq.s32.totalorder %s16, 1
      %p95 = scmp.ne.s32.totalorder %s90, %s92
      %p96 = scmp.eq.s32.totalorder %s16, 0
      %p97 = por %p95, %p96
      %p98 = scmp.ne.s32.totalorder %s90, %s92
      %p99 = scmp.eq.s32.totalorder %s21, 1
      %p100 = por %p98, %p99
      %p101 = scmp.ne.s32.totalorder %s92, %s93
      %p102 = scmp.eq.s32.totalorder %s21, 0
      %p103 = por %p101, %p102
      %p104 = scmp.ne.s32.totalorder %s92, %s93
      %p105 = scmp.eq.s32.totalorder %s22, 1
      %p106 = por %p104, %p105
      %p108 = scmp.ne.s32.totalorder %s93, %s107
      %p109 = scmp.eq.s32.totalorder %s22, 0
      %p110 = por %p108, %p109
      %s112 = sadd.s32 %s111, 1
      %p115 = scmp.eq.s32.totalorder %s16, 1
      %p116 = scmp.ne.s32.totalorder %s111, %s113
      %p117 = scmp.eq.s32.totalorder %s16, 0
      %p118 = por %p116, %p117
      %p119 = scmp.ne.s32.totalorder %s111, %s113
      %p120 = scmp.eq.s32.totalorder %s21, 1
      %p121 = por %p119, %p120
      %p122 = scmp.ne.s32.totalorder %s113, %s114
      %p123 = scmp.eq.s32.totalorder %s21, 0
      %p124 = por %p122, %p123
      %p125 = scmp.ne.s32.totalorder %s113, %s114
      %p126 = scmp.eq.s32.totalorder %s22, 1
      %p127 = por %p125, %p126
      %p129 = scmp.ne.s32.totalorder %s114, %s128
      %p130 = scmp.eq.s32.totalorder %s22, 0
      %p131 = por %p129, %p130
      %s132 = ssub.s32 %s24, %s31
      %s133 = ssub.s32 %s23, %s35
      %s134 = sor.u32 %s132, %s133
      %p135 = scmp.eq.s32.totalorder %s134, 0
      %s137 = sadd.s32 %s136, 1
      %s138 = scalar_select %p135, %s136, %s137
      %p141 = pneg %p135
      %p142 = scmp.eq.s32.totalorder %s16, 1
      %p143 = por %p141, %p142
      %p144 = scmp.ne.s32.totalorder %s136, %s139
      %p145 = scmp.eq.s32.totalorder %s16, 0
      %p146 = por %p144, %p145
      %p147 = scmp.ne.s32.totalorder %s136, %s139
      %p148 = scmp.eq.s32.totalorder %s21, 1
      %p149 = por %p147, %p148
      %p150 = scmp.ne.s32.totalorder %s139, %s140
      %p151 = scmp.eq.s32.totalorder %s21, 0
      %p152 = por %p150, %p151
      %p153 = scmp.ne.s32.totalorder %s139, %s140
      %p154 = scmp.eq.s32.totalorder %s22, 1
      %p155 = por %p153, %p154
      %p157 = scmp.ne.s32.totalorder %s140, %s156
      %p158 = scmp.eq.s32.totalorder %s22, 0
      %p159 = por %p157, %p158
      %p160 = scmp.le.s32.totalorder 1, %s16
      %p161 = scmp.lt.s32.totalorder %s16, 3
      %p162 = pnand %p160, %p161
      %p163 = pneg %p162
      // Predicated region
      $region9: #{tpu_custom_call.1} parent=5 // pred_check
        _
      $region10: #{tpu_custom_call.1} parent=5 // pred_check_branch
        %165 = sbr.rel (%p162) target = $region12
      $region11: #{tpu_custom_call.1} parent=5 // pred_region
        %s166 = ssub.s32 %s16, 1
        // Predicated region
        $region13: #{tpu_custom_call.1} parent=11 // pred_check
          %p167 = pneg %p82
        $region14: #{tpu_custom_call.1} parent=11 // pred_check_branch
          %169 = sbr.rel (%p167) target = $region16
        $region15: #{tpu_custom_call.1} parent=11 // pred_region
          %s170 = smul.u32 2, %s25
          %p171 = scmp.lt.s32.totalorder %s170, 1
          %s172 = scalar_select %p171, %s170, 1
          %s173 = smul.addr %s172, 4
          %s174 = scalar_lea.vmem %s1, %s173
          %s175 = smul.u32 2, %s25
        $region16: #{tpu_custom_call.1} parent=11 // pred_fallthru
          _
        // Predicated region
        $region17: #{tpu_custom_call.1} parent=11 // pred_check
          %p176 = pneg %p103
        $region18: #{tpu_custom_call.1} parent=11 // pred_check_branch
          %178 = sbr.rel (%p176) target = $region20
        $region19: #{tpu_custom_call.1} parent=11 // pred_region
          _
        $region20: #{tpu_custom_call.1} parent=11 // pred_fallthru
          _
        // Predicated region
        $region21: #{tpu_custom_call.1} parent=11 // pred_check
          %p179 = pneg %p124
        $region22: #{tpu_custom_call.1} parent=11 // pred_check_branch
          %181 = sbr.rel (%p179) target = $region24
        $region23: #{tpu_custom_call.1} parent=11 // pred_region
          _
        $region24: #{tpu_custom_call.1} parent=11 // pred_fallthru
          _
      $region12: #{tpu_custom_call.1} parent=5 // pred_fallthru
        _
      %p182 = scmp.lt.s32.totalorder %s16, 2
      // Predicated region
      $region25: #{tpu_custom_call.1} parent=5 // pred_check
        %p183 = pneg %p182
      $region26: #{tpu_custom_call.1} parent=5 // pred_check_branch
        %185 = sbr.rel (%p183) target = $region28
      $region27: #{tpu_custom_call.1} parent=5 // pred_region
        // Predicated region
        $region29: #{tpu_custom_call.1} parent=27 // pred_check
          %p186 = pneg %p50
        $region30: #{tpu_custom_call.1} parent=27 // pred_check_branch
          %188 = sbr.rel (%p186) target = $region32
        $region31: #{tpu_custom_call.1} parent=27 // pred_region
          %s189 = sand.u32 %s40, 1
          %s190 = scalar_lea.sflag [#allocation4], %s189
          %s191 = sand.u32 %s40, 1
          %s192 = smul.addr %s191, 64
          %s193 = scalar_lea.vmem [#allocation3], %s192
          %s194 = smul.u32 2, %s23
          %s196 = ssub.s32 1024, 1024
          %197 = vsyncadd %s190, %s196
          %s198 = smul.addr %s24, 8
          %s199 = sadd.s32 %s194, %s198
          %s200 = smul.addr %s199, 128
          %s201 = scalar_lea.hbm %s0, %s200
          %s202 = sshll.u32 %s193, 4
          %s203 = int_to_ptr.vmem [resolvable:$true] %s202
          %208 = dma.hbm_to_vmem [thread:$0]  %s201, 1024, %s203, %s190, 256, 256, 16
        $region32: #{tpu_custom_call.1} parent=27 // pred_fallthru
          _
      $region28: #{tpu_custom_call.1} parent=5 // pred_fallthru
        _
      %p209 = scmp.le.s32.totalorder 1, %s16
      %p210 = scmp.lt.s32.totalorder %s16, 3
      %p211 = pnand %p209, %p210
      %p212 = pneg %p211
      // Predicated region
      $region33: #{tpu_custom_call.1} parent=5 // pred_check
        _
      $region34: #{tpu_custom_call.1} parent=5 // pred_check_branch
        %214 = sbr.rel (%p211) target = $region36
      $region35: #{tpu_custom_call.1} parent=5 // pred_region
        %s215 = ssub.s32 %s16, 1
        %s216 = sand.u32 %s43, 1
        %s217 = scalar_lea.sflag [#allocation4], %s216
        %s218 = sand.u32 %s43, 1
        %s219 = smul.addr %s218, 64
        %s220 = scalar_lea.vmem [#allocation3], %s219
        // Predicated region
        $region37: #{tpu_custom_call.1} parent=35 // pred_check
          %p221 = pneg %p56
        $region38: #{tpu_custom_call.1} parent=35 // pred_check_branch
          %223 = sbr.rel (%p221) target = $region40
        $region39: #{tpu_custom_call.1} parent=35 // pred_region
          %224 = dma.done %s217, 1024
        $region40: #{tpu_custom_call.1} parent=35 // pred_fallthru
          _
        %s225 = sand.u32 %s43, 1
        %s226 = scalar_lea.sflag [#allocation4], %s225
        %s227 = sand.u32 %s43, 1
        %s228 = smul.addr %s227, 64
        %s229 = scalar_lea.vmem [#allocation3], %s228
        %p230 = pneg %p56
        %p231 = pneg %p53
        %s232 = smul.u32 2, %s25
        %p233 = scmp.lt.s32.totalorder %s232, 1
        %s234 = scalar_select %p233, %s232, 1
        %s235 = smul.addr %s234, 4
        %s236 = scalar_lea.vmem %s1, %s235
        %p237 = pneg %p82
        %p238 = pneg %p79
        %p239 = pneg %p103
        %p240 = pneg %p100
        %p241 = pneg %p124
        %p242 = pneg %p121
        %p243 = pneg %p152
        %p244 = pneg %p149
        %s245 = sand.u32 %s139, 1
        %s246 = scalar_lea.sflag [#allocation5], %s245
        %s247 = sand.u32 %s139, 1
        %s248 = smul.addr %s247, 64
        %s249 = scalar_lea.vmem [#allocation6], %s248
        %s250 = smul.u32 2, %s25
        %s251 = smul.u32 2, %s25
        %p252 = scmp.lt.s32.totalorder %s251, 1
        %s253 = scalar_select %p252, %s251, 1
        %s254 = smul.addr %s253, 4
        %s255 = scalar_lea.vmem %s1, %s254
        %s256 = smul.u32 2, %s25
        %s257 = smul.u32 2, %s25
        %p258 = scmp.eq.s32.totalorder %s26, 0
        // Predicated region
        $region41: #{tpu_custom_call.1} parent=35 // pred_check
          %p259 = pneg %p258
        $region42: #{tpu_custom_call.1} parent=35 // pred_check_branch
          %261 = sbr.rel (%p259) target = $region44
        $region43: #{tpu_custom_call.1} parent=35 // pred_region
          %v262 = vld [vmem:[%s255] sm:$0xff]
          %v263 = vld [vmem:[%s2] sm:$0xff]
          %v264 = vld [vmem:[%s2 + $0x8] sm:$0xff]
          %v265 = vld [vmem:[%s2 + $0x10] sm:$0xff]
          %v266 = vld [vmem:[%s2 + $0x18] sm:$0xff]
          %268 = vset.pattern.permute.xlu0 0
          %269 = vperm.xlu0 %268, %v263
          %v270 = vpop.permute.xlu0 %269
          %273 = vset.pattern.permute.xlu0 0
          %274 = vperm.xlu0 %273, %v264
          %v275 = vpop.permute.xlu0 %274
          %278 = vset.pattern.permute.xlu0 0
          %279 = vperm.xlu0 %278, %v265
          %v280 = vpop.permute.xlu0 %279
          %283 = vset.pattern.permute.xlu0 0
          %284 = vperm.xlu0 %283, %v266
          %v285 = vpop.permute.xlu0 %284
          %v288 = vlaneseq
          %v289 = vshrl.u32 %v288, 7
          %v290 = vsub.s32 0, %v289
          %v291 = vrot.slane %v262, %v290
          %v292 = vlaneseq
          %v293 = vshrl.u32 %v292, 7
          %v294 = vsub.s32 4, %v293
          %v295 = vrot.slane %v262, %v294
          %v298 = vlaneseq
          %v299 = vshrl.u32 %v298, 7
          %v300 = vsub.s32 0, %v299
          %v301 = vrot.slane %v291, %v300
          %v302 = vlaneseq
          %v303 = vshrl.u32 %v302, 7
          %v304 = vsub.s32 0, %v303
          %v305 = vrot.slane %v295, %v304
          %v306 = vmul.f32 %v270, %v301
          %v307 = vmul.f32 %v270, %v305
          %v308 = vmul.f32 %v275, %v301
          %v309 = vmul.f32 %v275, %v305
          %v310 = vmul.f32 %v280, %v301
          %v311 = vmul.f32 %v280, %v305
          %v312 = vmul.f32 %v285, %v301
          %v313 = vmul.f32 %v285, %v305
          %314 = vset.pattern.permute.xlu0 1
          %315 = vperm.xlu0 %314, %v263
          %v316 = vpop.permute.xlu0 %315
          %318 = vset.pattern.permute.xlu0 1
          %319 = vperm.xlu0 %318, %v264
          %v320 = vpop.permute.xlu0 %319
          %322 = vset.pattern.permute.xlu0 1
          %323 = vperm.xlu0 %322, %v265
          %v324 = vpop.permute.xlu0 %323
          %326 = vset.pattern.permute.xlu0 1
          %327 = vperm.xlu0 %326, %v266
          %v328 = vpop.permute.xlu0 %327
          %v330 = vlaneseq
          %v331 = vshrl.u32 %v330, 7
          %v332 = vsub.s32 1, %v331
          %v333 = vrot.slane %v262, %v332
          %v334 = vlaneseq
          %v335 = vshrl.u32 %v334, 7
          %v336 = vsub.s32 5, %v335
          %v337 = vrot.slane %v262, %v336
          %v340 = vlaneseq
          %v341 = vshrl.u32 %v340, 7
          %v342 = vsub.s32 1, %v341
          %v343 = vrot.slane %v333, %v342
          %v344 = vlaneseq
          %v345 = vshrl.u32 %v344, 7
          %v346 = vsub.s32 1, %v345
          %v347 = vrot.slane %v337, %v346
          %v348 = vmul.f32 %v316, %v343
          %v349 = vmul.f32 %v316, %v347
          %v350 = vmul.f32 %v320, %v343
          %v351 = vmul.f32 %v320, %v347
          %v352 = vmul.f32 %v324, %v343
          %v353 = vmul.f32 %v324, %v347
          %v354 = vmul.f32 %v328, %v343
          %v355 = vmul.f32 %v328, %v347
          %v356 = vadd.f32 %v306, %v348
          %v357 = vadd.f32 %v307, %v349
          %v358 = vadd.f32 %v308, %v350
          %v359 = vadd.f32 %v309, %v351
          %v360 = vadd.f32 %v310, %v352
          %v361 = vadd.f32 %v311, %v353
          %v362 = vadd.f32 %v312, %v354
          %v363 = vadd.f32 %v313, %v355
          %364 = vset.pattern.permute.xlu0 2
          %365 = vperm.xlu0 %364, %v263
          %v366 = vpop.permute.xlu0 %365
          %368 = vset.pattern.permute.xlu0 2
          %369 = vperm.xlu0 %368, %v264
          %v370 = vpop.permute.xlu0 %369
          %372 = vset.pattern.permute.xlu0 2
          %373 = vperm.xlu0 %372, %v265
          %v374 = vpop.permute.xlu0 %373
          %376 = vset.pattern.permute.xlu0 2
          %377 = vperm.xlu0 %376, %v266
          %v378 = vpop.permute.xlu0 %377
          %v380 = vlaneseq
          %v381 = vshrl.u32 %v380, 7
          %v382 = vsub.s32 2, %v381
          %v383 = vrot.slane %v262, %v382
          %v384 = vlaneseq
          %v385 = vshrl.u32 %v384, 7
          %v386 = vsub.s32 6, %v385
          %v387 = vrot.slane %v262, %v386
          %v390 = vlaneseq
          %v391 = vshrl.u32 %v390, 7
          %v392 = vsub.s32 2, %v391
          %v393 = vrot.slane %v383, %v392
          %v394 = vlaneseq
          %v395 = vshrl.u32 %v394, 7
          %v396 = vsub.s32 2, %v395
          %v397 = vrot.slane %v387, %v396
          %v398 = vmul.f32 %v366, %v393
          %v399 = vmul.f32 %v366, %v397
          %v400 = vmul.f32 %v370, %v393
          %v401 = vmul.f32 %v370, %v397
          %v402 = vmul.f32 %v374, %v393
          %v403 = vmul.f32 %v374, %v397
          %v404 = vmul.f32 %v378, %v393
          %v405 = vmul.f32 %v378, %v397
          %v406 = vadd.f32 %v356, %v398
          %v407 = vadd.f32 %v357, %v399
          %v408 = vadd.f32 %v358, %v400
          %v409 = vadd.f32 %v359, %v401
          %v410 = vadd.f32 %v360, %v402
          %v411 = vadd.f32 %v361, %v403
          %v412 = vadd.f32 %v362, %v404
          %v413 = vadd.f32 %v363, %v405
          %414 = vset.pattern.permute.xlu0 3
          %415 = vperm.xlu0 %414, %v263
          %v416 = vpop.permute.xlu0 %415
          %418 = vset.pattern.permute.xlu0 3
          %419 = vperm.xlu0 %418, %v264
          %v420 = vpop.permute.xlu0 %419
          %422 = vset.pattern.permute.xlu0 3
          %423 = vperm.xlu0 %422, %v265
          %v424 = vpop.permute.xlu0 %423
          %426 = vset.pattern.permute.xlu0 3
          %427 = vperm.xlu0 %426, %v266
          %v428 = vpop.permute.xlu0 %427
          %v430 = vlaneseq
          %v431 = vshrl.u32 %v430, 7
          %v432 = vsub.s32 3, %v431
          %v433 = vrot.slane %v262, %v432
          %v434 = vlaneseq
          %v435 = vshrl.u32 %v434, 7
          %v436 = vsub.s32 7, %v435
          %v437 = vrot.slane %v262, %v436
          %v440 = vlaneseq
          %v441 = vshrl.u32 %v440, 7
          %v442 = vsub.s32 3, %v441
          %v443 = vrot.slane %v433, %v442
          %v444 = vlaneseq
          %v445 = vshrl.u32 %v444, 7
          %v446 = vsub.s32 3, %v445
          %v447 = vrot.slane %v437, %v446
          %v448 = vmul.f32 %v416, %v443
          %v449 = vmul.f32 %v416, %v447
          %v450 = vmul.f32 %v420, %v443
          %v451 = vmul.f32 %v420, %v447
          %v452 = vmul.f32 %v424, %v443
          %v453 = vmul.f32 %v424, %v447
          %v454 = vmul.f32 %v428, %v443
          %v455 = vmul.f32 %v428, %v447
          %v456 = vadd.f32 %v406, %v448
          %v457 = vadd.f32 %v407, %v449
          %v458 = vadd.f32 %v408, %v450
          %v459 = vadd.f32 %v409, %v451
          %v460 = vadd.f32 %v410, %v452
          %v461 = vadd.f32 %v411, %v453
          %v462 = vadd.f32 %v412, %v454
          %v463 = vadd.f32 %v413, %v455
          %v464 = vld [vmem:[%s3] sm:$0xff]
          %v465 = vld [vmem:[%s3 + $0x8] sm:$0xff]
          %v466 = vld [vmem:[%s3 + $0x10] sm:$0xff]
          %v467 = vld [vmem:[%s3 + $0x18] sm:$0xff]
          %469 = vset.pattern.permute.xlu0 0
          %470 = vperm.xlu0 %469, %v464
          %v471 = vpop.permute.xlu0 %470
          %474 = vset.pattern.permute.xlu0 0
          %475 = vperm.xlu0 %474, %v465
          %v476 = vpop.permute.xlu0 %475
          %479 = vset.pattern.permute.xlu0 0
          %480 = vperm.xlu0 %479, %v466
          %v481 = vpop.permute.xlu0 %480
          %484 = vset.pattern.permute.xlu0 0
          %485 = vperm.xlu0 %484, %v467
          %v486 = vpop.permute.xlu0 %485
          %v488 = vadd.f32 %v456, %v471
          %v489 = vadd.f32 %v457, %v471
          %v490 = vadd.f32 %v458, %v476
          %v491 = vadd.f32 %v459, %v476
          %v492 = vadd.f32 %v460, %v481
          %v493 = vadd.f32 %v461, %v481
          %v494 = vadd.f32 %v462, %v486
          %v495 = vadd.f32 %v463, %v486
          %496 = vst [vmem:[#allocation2] sm:$0xff] %v488
          %497 = vst [vmem:[#allocation2 + $0x8] sm:$0xff] %v489
          %498 = vst [vmem:[#allocation2 + $0x10] sm:$0xff] %v490
          %499 = vst [vmem:[#allocation2 + $0x18] sm:$0xff] %v491
          %500 = vst [vmem:[#allocation2 + $0x20] sm:$0xff] %v492
          %501 = vst [vmem:[#allocation2 + $0x28] sm:$0xff] %v493
          %502 = vst [vmem:[#allocation2 + $0x30] sm:$0xff] %v494
          %503 = vst [vmem:[#allocation2 + $0x38] sm:$0xff] %v495
        $region44: #{tpu_custom_call.1} parent=35 // pred_fallthru
          _
        %v504 = vld [vmem:[%s220] sm:$0xff]
        %v505 = vld [vmem:[%s220 + $0x8] sm:$0xff]
        %v506 = vld [vmem:[%s220 + $0x10] sm:$0xff]
        %v507 = vld [vmem:[%s220 + $0x18] sm:$0xff]
        %v508 = vld [vmem:[%s220 + $0x20] sm:$0xff]
        %v509 = vld [vmem:[%s220 + $0x28] sm:$0xff]
        %v510 = vld [vmem:[%s220 + $0x30] sm:$0xff]
        %v511 = vld [vmem:[%s220 + $0x38] sm:$0xff]
        %v512 = vld [vmem:[#allocation2] sm:$0xff]
        %v513 = vld [vmem:[#allocation2 + $0x8] sm:$0xff]
        %v514 = vld [vmem:[#allocation2 + $0x10] sm:$0xff]
        %v515 = vld [vmem:[#allocation2 + $0x18] sm:$0xff]
        %v516 = vld [vmem:[#allocation2 + $0x20] sm:$0xff]
        %v517 = vld [vmem:[#allocation2 + $0x28] sm:$0xff]
        %v518 = vld [vmem:[#allocation2 + $0x30] sm:$0xff]
        %v519 = vld [vmem:[#allocation2 + $0x38] sm:$0xff]
        %v520 = vadd.f32 %v504, %v512
        %v521 = vadd.f32 %v505, %v513
        %v522 = vadd.f32 %v506, %v514
        %v523 = vadd.f32 %v507, %v515
        %v524 = vadd.f32 %v508, %v516
        %v525 = vadd.f32 %v509, %v517
        %v526 = vadd.f32 %v510, %v518
        %v527 = vadd.f32 %v511, %v519
        %528 = vst [vmem:[%s249] sm:$0xff] %v520
        %529 = vst [vmem:[%s249 + $0x8] sm:$0xff] %v521
        %530 = vst [vmem:[%s249 + $0x10] sm:$0xff] %v522
        %531 = vst [vmem:[%s249 + $0x18] sm:$0xff] %v523
        %532 = vst [vmem:[%s249 + $0x20] sm:$0xff] %v524
        %533 = vst [vmem:[%s249 + $0x28] sm:$0xff] %v525
        %534 = vst [vmem:[%s249 + $0x30] sm:$0xff] %v526
        %535 = vst [vmem:[%s249 + $0x38] sm:$0xff] %v527
        %s536 = sand.u32 %s139, 1
        %s537 = scalar_lea.sflag [#allocation5], %s536
        %s538 = sand.u32 %s139, 1
        %s539 = smul.addr %s538, 64
        %s540 = scalar_lea.vmem [#allocation6], %s539
        // Predicated region
        $region45: #{tpu_custom_call.1} parent=35 // pred_check
          %p541 = pneg %p149
        $region46: #{tpu_custom_call.1} parent=35 // pred_check_branch
          %543 = sbr.rel (%p541) target = $region48
        $region47: #{tpu_custom_call.1} parent=35 // pred_region
          %s544 = smul.u32 2, %s25
          %s546 = ssub.s32 1024, 1024
          %547 = vsyncadd %s537, %s546
          %s548 = smul.addr %s26, 8
          %s549 = sadd.s32 %s544, %s548
          %s550 = smul.addr %s549, 128
          %s551 = scalar_lea.hbm %s4, %s550
          %s552 = sshll.u32 %s540, 4
          %s553 = int_to_ptr.vmem [resolvable:$true] %s552
          %558 = dma.vmem_to_hbm [thread:$0]  %s553, 1024, %s551, %s537, 256, 256, 16
        $region48: #{tpu_custom_call.1} parent=35 // pred_fallthru
          _
      $region36: #{tpu_custom_call.1} parent=5 // pred_fallthru
        _
      %p559 = scmp.le.s32.totalorder 2, %s16
      // Predicated region
      $region49: #{tpu_custom_call.1} parent=5 // pred_check
        %p560 = pneg %p559
      $region50: #{tpu_custom_call.1} parent=5 // pred_check_branch
        %562 = sbr.rel (%p560) target = $region52
      $region51: #{tpu_custom_call.1} parent=5 // pred_region
        %s563 = ssub.s32 %s16, 2
        // Predicated region
        $region53: #{tpu_custom_call.1} parent=51 // pred_check
          %p564 = pneg %p155
        $region54: #{tpu_custom_call.1} parent=51 // pred_check_branch
          %566 = sbr.rel (%p564) target = $region56
        $region55: #{tpu_custom_call.1} parent=51 // pred_region
          %s567 = sand.u32 %s140, 1
          %s568 = scalar_lea.sflag [#allocation5], %s567
          %s569 = sand.u32 %s140, 1
          %s570 = smul.addr %s569, 64
          %s571 = scalar_lea.vmem [#allocation6], %s570
          %572 = dma.done %s568, 1024
        $region56: #{tpu_custom_call.1} parent=51 // pred_fallthru
          _
      $region52: #{tpu_custom_call.1} parent=5 // pred_fallthru
        _
    $region6: #{tpu_custom_call.1} parent=1 // loop_footer
      %s20 = sadd.s32 1, %s16
    $region7: #{tpu_custom_call.1} parent=1 // loop_footer_branch
      %15 = sbr.rel target = $region3
    $region8: #{tpu_custom_call.1} parent=1 // loop_exit
      _
    %573 = vsyncpa [#allocation4], 1
    %s574 = scalar_lea.sflag [#allocation4], 1
    %575 = vsyncpa %s574, 1
    %576 = vsyncpa [#allocation5], 1
    %s577 = scalar_lea.sflag [#allocation5], 1
    %578 = vsyncpa %s577, 1

</llo_original>
